<compile_context>
chip_gen: v7x
topology: tpu7x:2x2x1
jax: 0.10.0
libtpu: 0.0.40
codegen_flags: <defaults>
</compile_context>

<pallas_src>
import jax
import jax.numpy as jnp
from jax import lax
from jax.experimental import pallas as pl
from jax.experimental.pallas import tpu as pltpu


def mlp_kernel(x_ref, w1_ref, b1_ref, w2_ref, b2_ref, w3_ref, b3_ref, o_ref):
    # x_ref: (TB, S)   w1: (H, S)  b1: (H, 1)
    # w2: (H, H)       b2: (H, 1)
    # w3: (A_pad, H)   b3: (A_pad, 1)   o_ref: (A_pad, TB)

    # Layer 1: contract S against S, i.e. w1 @ x.T, done as a transposed-RHS
    # matmul so the batch ends up on lanes without a separate wrapper transpose.
    h = lax.dot_general(
        w1_ref[...], x_ref[...],
        dimension_numbers=(((1,), (1,)), ((), ())),
        preferred_element_type=jnp.float32,
    ) + b1_ref[...]                                  # (H, TB)
    h = jnp.maximum(h, 0.0)

    # Layer 2: Linear + ReLU (lane-dense all the way).
    h = jnp.dot(w2_ref[...], h, preferred_element_type=jnp.float32) + b2_ref[...]
    h = jnp.maximum(h, 0.0)

    # Layer 3: Linear (no activation) -- full (8, TB) tile store.
    o_ref[...] = (
        jnp.dot(w3_ref[...], h, preferred_element_type=jnp.float32) + b3_ref[...]
    )


def rl_hedging_forward(state, params, *, tile_b=2048):
    """Pallas forward pass of RLHedging.model.

    state:  (B, state_dim) float32
    params: dict with w1 (H, S), b1 (H, 1), w2 (H, H), b2 (H, 1),
            w3 (A, H), b3 (A, 1)   (PyTorch (out, in) weight convention)
    returns (B, action_dim) float32
    """
    w1, b1 = params["w1"], params["b1"]
    w2, b2 = params["w2"], params["b2"]
    w3, b3 = params["w3"], params["b3"]

    B, S = state.shape
    H = w1.shape[0]
    A = w3.shape[0]

    # Pad the tiny output head to a full sublane tile (>=8 rows, multiple of 8)
    # so the final store is an unmasked vreg write; zero rows sliced off below.
    A_pad = max(8, -(-A // 8) * 8)
    if A_pad != A:
        w3p = jnp.pad(w3, ((0, A_pad - A), (0, 0)))
        b3p = jnp.pad(b3, ((0, A_pad - A), (0, 0)))
    else:
        w3p, b3p = w3, b3

    # Grid collapse for small batches: one block covering the whole batch
    # (no wrapper pad, single pipeline step).  Big batches: wide batch tiles.
    if B <= tile_b:
        TB, n_tiles, x = B, 1, state
    else:
        TB = int(tile_b)
        n_tiles = pl.cdiv(B, TB)
        b_total = n_tiles * TB
        x = jnp.pad(state, ((0, b_total - B), (0, 0))) if b_total != B else state
    b_total = n_tiles * TB

    resident = lambda a: pl.BlockSpec(a.shape, lambda i: (0, 0))  # VMEM-resident

    flops = 2 * b_total * (S * H + H * H + H * A_pad)
    bytes_accessed = 4 * (
        b_total * (S + A_pad) + w1.size + w2.size + w3p.size + b1.size + b2.size + b3p.size
    )

    out_t = pl.pallas_call(
        mlp_kernel,
        out_shape=jax.ShapeDtypeStruct((A_pad, b_total), jnp.float32),
        grid=(n_tiles,),
        in_specs=[
            pl.BlockSpec((TB, S), lambda i: (i, 0)),   # batch tile, pipelined
            resident(w1), resident(b1),
            resident(w2), resident(b2),
            resident(w3p), resident(b3p),
        ],
        out_specs=pl.BlockSpec((A_pad, TB), lambda i: (0, i)),
        compiler_params=pltpu.CompilerParams(
            dimension_semantics=("parallel",),          # megacore split on v7x
        ),
        cost_estimate=pl.CostEstimate(
            flops=int(flops), transcendentals=0, bytes_accessed=int(bytes_accessed)
        ),
    )(x, w1, b1, w2, b2, w3p, b3p)

    # (A_pad, b_total) -> (B, action_dim); tiny slice+transpose fused by XLA.
    return out_t[:A, :B].T


def init_params(key, state_dim, action_dim, hidden_dim):
    """nn.Linear-style init: U(-1/sqrt(fan_in), +1/sqrt(fan_in))."""
    ks = jax.random.split(key, 6)

    def linear(kw, kb, fan_in, fan_out):
        bound = 1.0 / jnp.sqrt(jnp.float32(fan_in))
        w = jax.random.uniform(kw, (fan_out, fan_in), jnp.float32, -bound, bound)
        b = jax.random.uniform(kb, (fan_out, 1), jnp.float32, -bound, bound)
        return w, b

    w1, b1 = linear(ks[0], ks[1], state_dim, hidden_dim)
    w2, b2 = linear(ks[2], ks[3], hidden_dim, hidden_dim)
    w3, b3 = linear(ks[4], ks[5], hidden_dim, action_dim)
    return {"w1": w1, "b1": b1, "w2": w2, "b2": b2, "w3": w3, "b3": b3}


def _reference(state, params):
    hp = jax.lax.Precision.HIGHEST
    h = jnp.maximum(jnp.dot(state, params["w1"].T, precision=hp) + params["b1"].T, 0.0)
    h = jnp.maximum(jnp.dot(h, params["w2"].T, precision=hp) + params["b2"].T, 0.0)
    return jnp.dot(h, params["w3"].T, precision=hp) + params["b3"].T


if __name__ == "__main__":
    # Module-implied dims: state_dim=16, hidden_dim=32, action_dim=4.
    B, STATE_DIM, HIDDEN_DIM, ACTION_DIM = 500, 16, 32, 4

    key = jax.random.PRNGKey(0)
    k_params, k_state = jax.random.split(key)
    params = init_params(k_params, STATE_DIM, ACTION_DIM, HIDDEN_DIM)
    state = jax.random.normal(k_state, (B, STATE_DIM), jnp.float32)

    # Small-batch path: single block, single grid step, no wrapper pad/transpose.
    out = jax.block_until_ready(rl_hedging_forward(state, params))
    ref = _reference(state, params)
    assert out.shape == (B, ACTION_DIM)
    assert jnp.allclose(out, ref, atol=1e-4, rtol=1e-4), float(jnp.max(jnp.abs(out - ref)))

    # Large-batch / ragged path: forces multi-step grid (tile_b=128 -> 4 tiles,
    # last one padded) to exercise the pipelined branch as well.
    out2 = jax.block_until_ready(rl_hedging_forward(state, params, tile_b=128))
    assert out2.shape == (B, ACTION_DIM)
    assert jnp.allclose(out2, ref, atol=1e-4, rtol=1e-4), float(jnp.max(jnp.abs(out2 - ref)))

    # TODO(synk): train_step (Adam update + MSE backward) is optimizer state /
    # autodiff, not a forward-pass op; only forward/predict are kernelized.
    print("KERNEL_OK")
</pallas_src>

<mosaic_0001>
module attributes {stable_mosaic.version = 11 : i64} {
  func.func @mlp_kernel(%arg0: i32, %arg1: memref<500x16xf32, #tpu.memory_space<vmem>>, %arg2: memref<32x16xf32, #tpu.memory_space<vmem>>, %arg3: memref<32x1xf32, #tpu.memory_space<vmem>>, %arg4: memref<32x32xf32, #tpu.memory_space<vmem>>, %arg5: memref<32x1xf32, #tpu.memory_space<vmem>>, %arg6: memref<8x32xf32, #tpu.memory_space<vmem>>, %arg7: memref<8x1xf32, #tpu.memory_space<vmem>>, %arg8: memref<8x500xf32, #tpu.memory_space<vmem>>) attributes {dimension_semantics = [#tpu.dimension_semantics<parallel>], iteration_bounds = array<i64: 1>, scalar_prefetch = 0 : i64, scratch_operands = 0 : i64, tpu.core_type = #tpu.core_type<tc>, window_params = [{transform_indices = @transform_0, window_bounds = array<i64: 500, 16>}, {pipeline_mode = #tpu.pipeline_mode<synchronous>, transform_indices = @transform_1, window_bounds = array<i64: 32, 16>}, {pipeline_mode = #tpu.pipeline_mode<synchronous>, transform_indices = @transform_2, window_bounds = array<i64: 32, 1>}, {pipeline_mode = #tpu.pipeline_mode<synchronous>, transform_indices = @transform_3, window_bounds = array<i64: 32, 32>}, {pipeline_mode = #tpu.pipeline_mode<synchronous>, transform_indices = @transform_4, window_bounds = array<i64: 32, 1>}, {pipeline_mode = #tpu.pipeline_mode<synchronous>, transform_indices = @transform_5, window_bounds = array<i64: 8, 32>}, {pipeline_mode = #tpu.pipeline_mode<synchronous>, transform_indices = @transform_6, window_bounds = array<i64: 8, 1>}, {transform_indices = @transform_7, window_bounds = array<i64: 8, 500>}]} {
    %c0 = arith.constant 0 : index
    %c0_0 = arith.constant 0 : index
    %0 = vector.load %arg2[%c0, %c0_0] : memref<32x16xf32, #tpu.memory_space<vmem>>, vector<32x16xf32>
    %c0_1 = arith.constant 0 : index
    %c0_2 = arith.constant 0 : index
    %1 = vector.load %arg1[%c0_1, %c0_2] : memref<500x16xf32, #tpu.memory_space<vmem>>, vector<500x16xf32>
    %cst = arith.constant dense<0.000000e+00> : vector<32x500xf32>
    %2 = tpu.matmul %0, %1, %cst {dimension_numbers = #tpu.dot_dimension_numbers<[1], [1], [0], [0], [0, 0, 1, 0], [], []>} : vector<32x16xf32>, vector<500x16xf32>, vector<32x500xf32> -> vector<32x500xf32>
    %c0_3 = arith.constant 0 : index
    %c0_4 = arith.constant 0 : index
    %3 = vector.load %arg3[%c0_3, %c0_4] : memref<32x1xf32, #tpu.memory_space<vmem>>, vector<32x1xf32>
    %4 = vector.broadcast %3 : vector<32x1xf32> to vector<32x500xf32>
    %5 = arith.addf %2, %4 : vector<32x500xf32>
    %cst_5 = arith.constant 0.000000e+00 : f32
    %6 = vector.broadcast %cst_5 : f32 to vector<32x500xf32>
    %7 = arith.maximumf %5, %6 : vector<32x500xf32>
    %c0_6 = arith.constant 0 : index
    %c0_7 = arith.constant 0 : index
    %8 = vector.load %arg4[%c0_6, %c0_7] : memref<32x32xf32, #tpu.memory_space<vmem>>, vector<32x32xf32>
    %cst_8 = arith.constant dense<0.000000e+00> : vector<32x500xf32>
    %9 = tpu.matmul %8, %7, %cst_8 {dimension_numbers = #tpu.dot_dimension_numbers<[1], [0], [0], [1], [0, 0, 1, 1], [], []>} : vector<32x32xf32>, vector<32x500xf32>, vector<32x500xf32> -> vector<32x500xf32>
    %c0_9 = arith.constant 0 : index
    %c0_10 = arith.constant 0 : index
    %10 = vector.load %arg5[%c0_9, %c0_10] : memref<32x1xf32, #tpu.memory_space<vmem>>, vector<32x1xf32>
    %11 = vector.broadcast %10 : vector<32x1xf32> to vector<32x500xf32>
    %12 = arith.addf %9, %11 : vector<32x500xf32>
    %cst_11 = arith.constant 0.000000e+00 : f32
    %13 = vector.broadcast %cst_11 : f32 to vector<32x500xf32>
    %14 = arith.maximumf %12, %13 : vector<32x500xf32>
    %c0_12 = arith.constant 0 : index
    %c0_13 = arith.constant 0 : index
    %15 = vector.load %arg6[%c0_12, %c0_13] : memref<8x32xf32, #tpu.memory_space<vmem>>, vector<8x32xf32>
    %cst_14 = arith.constant dense<0.000000e+00> : vector<8x500xf32>
    %16 = tpu.matmul %15, %14, %cst_14 {dimension_numbers = #tpu.dot_dimension_numbers<[1], [0], [0], [1], [0, 0, 1, 1], [], []>} : vector<8x32xf32>, vector<32x500xf32>, vector<8x500xf32> -> vector<8x500xf32>
    %c0_15 = arith.constant 0 : index
    %c0_16 = arith.constant 0 : index
    %17 = vector.load %arg7[%c0_15, %c0_16] : memref<8x1xf32, #tpu.memory_space<vmem>>, vector<8x1xf32>
    %18 = vector.broadcast %17 : vector<8x1xf32> to vector<8x500xf32>
    %19 = arith.addf %16, %18 : vector<8x500xf32>
    %c0_17 = arith.constant 0 : index
    %c0_18 = arith.constant 0 : index
    %20 = vector.load %arg8[%c0_17, %c0_18] : memref<8x500xf32, #tpu.memory_space<vmem>>, vector<8x500xf32>
    tpu.vector_store %arg8[%c0_17, %c0_18], %19 {strides = array<i32>} : memref<8x500xf32, #tpu.memory_space<vmem>>, vector<8x500xf32>,
    return
  }
  func.func @transform_0(%arg0: i32) -> (i32, i32) {
    %c0_i32 = arith.constant 0 : i32
    %c0_i32_0 = arith.constant 0 : i32
    return %arg0, %c0_i32 : i32, i32
  }
  func.func @transform_1(%arg0: i32) -> (i32, i32) {
    %c0_i32 = arith.constant 0 : i32
    %c0_i32_0 = arith.constant 0 : i32
    %c0_i32_1 = arith.constant 0 : i32
    return %c0_i32, %c0_i32_0 : i32, i32
  }
  func.func @transform_2(%arg0: i32) -> (i32, i32) {
    %c0_i32 = arith.constant 0 : i32
    %c0_i32_0 = arith.constant 0 : i32
    %c0_i32_1 = arith.constant 0 : i32
    return %c0_i32, %c0_i32_0 : i32, i32
  }
  func.func @transform_3(%arg0: i32) -> (i32, i32) {
    %c0_i32 = arith.constant 0 : i32
    %c0_i32_0 = arith.constant 0 : i32
    %c0_i32_1 = arith.constant 0 : i32
    return %c0_i32, %c0_i32_0 : i32, i32
  }
  func.func @transform_4(%arg0: i32) -> (i32, i32) {
    %c0_i32 = arith.constant 0 : i32
    %c0_i32_0 = arith.constant 0 : i32
    %c0_i32_1 = arith.constant 0 : i32
    return %c0_i32, %c0_i32_0 : i32, i32
  }
  func.func @transform_5(%arg0: i32) -> (i32, i32) {
    %c0_i32 = arith.constant 0 : i32
    %c0_i32_0 = arith.constant 0 : i32
    %c0_i32_1 = arith.constant 0 : i32
    return %c0_i32, %c0_i32_0 : i32, i32
  }
  func.func @transform_6(%arg0: i32) -> (i32, i32) {
    %c0_i32 = arith.constant 0 : i32
    %c0_i32_0 = arith.constant 0 : i32
    %c0_i32_1 = arith.constant 0 : i32
    return %c0_i32, %c0_i32_0 : i32, i32
  }
  func.func @transform_7(%arg0: i32) -> (i32, i32) {
    %c0_i32 = arith.constant 0 : i32
    %c0_i32_0 = arith.constant 0 : i32
    return %c0_i32, %arg0 : i32, i32
  }
}

</mosaic_0001>

<llo_original>
// kernel: tpu_custom_call.1
$region0: #{tpu_custom_call.1}
  #allocation0 [shape = 'u32[]', space=smem, size = 0x4, offset = 0x4, fixed_abs, tag = 'smem constant byte address 0x4 - core index']
  #allocation1 [shape = 'u32[144,128]{1,0:T(1,128)}', space=vmem, size = 0x12000, scoped, tag = 'internal scratch']
  %s0 = inlined_call_operand.vmem [shape: f32[500,16], index: 0, kind: input, shape index: {}]
  %s1 = inlined_call_operand.vmem [shape: f32[32,16], index: 1, kind: input, shape index: {}]
  %s2 = inlined_call_operand.vmem [shape: f32[32,1], index: 2, kind: input, shape index: {}]
  %s3 = inlined_call_operand.vmem [shape: f32[32,32], index: 3, kind: input, shape index: {}]
  %s4 = inlined_call_operand.vmem [shape: f32[32,1], index: 4, kind: input, shape index: {}]
  %s5 = inlined_call_operand.vmem [shape: f32[8,32], index: 5, kind: input, shape index: {}]
  %s6 = inlined_call_operand.vmem [shape: f32[8,1], index: 6, kind: input, shape index: {}]
  %s7 = inlined_call_operand.hbm [shape: f32[8,500], index: 7, kind: output, shape index: {}]
  %s8 = sld [smem:[#allocation0]]
  $region38: #{tpu_custom_call.1} parent=0
    _
  %s10 = ssub.s32 1, %s8
  %s11 = scalar_select 0, %s10, %s8
  $region1: #{tpu_custom_call.1} parent=0
    #allocation2 [shape = 'u8[16384]{0}', space=vmem, size = 0x4000, scoped, tag = 'output window, operand 0, single buffered']
    #allocation3 [shape = 's32[1]{0}', space=sflag, size = 0x4, scoped, tag = 'scoped memory for tpu_custom_call.1']
    %12 = vsyncpa [#allocation3], 0
    // Predicated region
    $region2: #{tpu_custom_call.1} parent=1 // pred_check
      _
    $region3: #{tpu_custom_call.1} parent=1 // pred_check_branch
      %14 = sbr.rel (0) target = $region5
    $region4: #{tpu_custom_call.1} parent=1 // pred_region
      _
    $region5: #{tpu_custom_call.1} parent=1 // pred_fallthru
      _
    // Predicated region
    $region6: #{tpu_custom_call.1} parent=1 // pred_check
      _
    $region7: #{tpu_custom_call.1} parent=1 // pred_check_branch
      %16 = sbr.rel (0) target = $region9
    $region8: #{tpu_custom_call.1} parent=1 // pred_region
      _
    $region9: #{tpu_custom_call.1} parent=1 // pred_fallthru
      _
    // Predicated region
    $region10: #{tpu_custom_call.1} parent=1 // pred_check
      _
    $region11: #{tpu_custom_call.1} parent=1 // pred_check_branch
      %18 = sbr.rel (0) target = $region13
    $region12: #{tpu_custom_call.1} parent=1 // pred_region
      _
    $region13: #{tpu_custom_call.1} parent=1 // pred_fallthru
      _
    // Predicated region
    $region14: #{tpu_custom_call.1} parent=1 // pred_check
      _
    $region15: #{tpu_custom_call.1} parent=1 // pred_check_branch
      %20 = sbr.rel (0) target = $region17
    $region16: #{tpu_custom_call.1} parent=1 // pred_region
      _
    $region17: #{tpu_custom_call.1} parent=1 // pred_fallthru
      _
    // Predicated region
    $region18: #{tpu_custom_call.1} parent=1 // pred_check
      _
    $region19: #{tpu_custom_call.1} parent=1 // pred_check_branch
      %22 = sbr.rel (0) target = $region21
    $region20: #{tpu_custom_call.1} parent=1 // pred_region
      _
    $region21: #{tpu_custom_call.1} parent=1 // pred_fallthru
      _
    // Predicated region
    $region22: #{tpu_custom_call.1} parent=1 // pred_check
      _
    $region23: #{tpu_custom_call.1} parent=1 // pred_check_branch
      %24 = sbr.rel (0) target = $region25
    $region24: #{tpu_custom_call.1} parent=1 // pred_region
      _
    $region25: #{tpu_custom_call.1} parent=1 // pred_fallthru
      _
    // Predicated region
    $region26: #{tpu_custom_call.1} parent=1 // pred_check
      _
    $region27: #{tpu_custom_call.1} parent=1 // pred_check_branch
      %26 = sbr.rel (0) target = $region29
    $region28: #{tpu_custom_call.1} parent=1 // pred_region
      _
    $region29: #{tpu_custom_call.1} parent=1 // pred_fallthru
      _
    %v27 = vld [vmem:[%s1] sm:$0xff]
    %v28 = vld [vmem:[%s1 + $0x8] sm:$0xff]
    %v29 = vld [vmem:[%s1 + $0x10] sm:$0xff]
    %v30 = vld [vmem:[%s1 + $0x18] sm:$0xff]
    %v31 = vld [vmem:[%s0] sm:$0xff]
    %v32 = vld [vmem:[%s0 + $0x8] sm:$0xff]
    %v33 = vld [vmem:[%s0 + $0x10] sm:$0xff]
    %v34 = vld [vmem:[%s0 + $0x18] sm:$0xff]
    %v35 = vld [vmem:[%s0 + $0x20] sm:$0xff]
    %v36 = vld [vmem:[%s0 + $0x28] sm:$0xff]
    %v37 = vld [vmem:[%s0 + $0x30] sm:$0xff]
    %v38 = vld [vmem:[%s0 + $0x38] sm:$0xff]
    %v39 = vld [vmem:[%s0 + $0x40] sm:$0xff]
    %v40 = vld [vmem:[%s0 + $0x48] sm:$0xff]
    %v41 = vld [vmem:[%s0 + $0x50] sm:$0xff]
    %v42 = vld [vmem:[%s0 + $0x58] sm:$0xff]
    %v43 = vld [vmem:[%s0 + $0x60] sm:$0xff]
    %v44 = vld [vmem:[%s0 + $0x68] sm:$0xff]
    %v45 = vld [vmem:[%s0 + $0x70] sm:$0xff]
    %v46 = vld [vmem:[%s0 + $0x78] sm:$0xff]
    %v47 = vld [vmem:[%s0 + $0x80] sm:$0xff]
    %v48 = vld [vmem:[%s0 + $0x88] sm:$0xff]
    %v49 = vld [vmem:[%s0 + $0x90] sm:$0xff]
    %v50 = vld [vmem:[%s0 + $0x98] sm:$0xff]
    %v51 = vld [vmem:[%s0 + $0xa0] sm:$0xff]
    %v52 = vld [vmem:[%s0 + $0xa8] sm:$0xff]
    %v53 = vld [vmem:[%s0 + $0xb0] sm:$0xff]
    %v54 = vld [vmem:[%s0 + $0xb8] sm:$0xff]
    %v55 = vld [vmem:[%s0 + $0xc0] sm:$0xff]
    %v56 = vld [vmem:[%s0 + $0xc8] sm:$0xff]
    %v57 = vld [vmem:[%s0 + $0xd0] sm:$0xff]
    %v58 = vld [vmem:[%s0 + $0xd8] sm:$0xff]
    %v59 = vld [vmem:[%s0 + $0xe0] sm:$0xff]
    %v60 = vld [vmem:[%s0 + $0xe8] sm:$0xff]
    %v61 = vld [vmem:[%s0 + $0xf0] sm:$0xff]
    %v62 = vld [vmem:[%s0 + $0xf8] sm:$0xff]
    %v63 = vld [vmem:[%s0 + $0x100] sm:$0xff]
    %v64 = vld [vmem:[%s0 + $0x108] sm:$0xff]
    %v65 = vld [vmem:[%s0 + $0x110] sm:$0xff]
    %v66 = vld [vmem:[%s0 + $0x118] sm:$0xff]
    %v67 = vld [vmem:[%s0 + $0x120] sm:$0xff]
    %v68 = vld [vmem:[%s0 + $0x128] sm:$0xff]
    %v69 = vld [vmem:[%s0 + $0x130] sm:$0xff]
    %v70 = vld [vmem:[%s0 + $0x138] sm:$0xff]
    %v71 = vld [vmem:[%s0 + $0x140] sm:$0xff]
    %v72 = vld [vmem:[%s0 + $0x148] sm:$0xff]
    %v73 = vld [vmem:[%s0 + $0x150] sm:$0xff]
    %v74 = vld [vmem:[%s0 + $0x158] sm:$0xff]
    %v75 = vld [vmem:[%s0 + $0x160] sm:$0xff]
    %v76 = vld [vmem:[%s0 + $0x168] sm:$0xff]
    %v77 = vld [vmem:[%s0 + $0x170] sm:$0xff]
    %v78 = vld [vmem:[%s0 + $0x178] sm:$0xff]
    %v79 = vld [vmem:[%s0 + $0x180] sm:$0xff]
    %v80 = vld [vmem:[%s0 + $0x188] sm:$0xff]
    %v81 = vld [vmem:[%s0 + $0x190] sm:$0xff]
    %v82 = vld [vmem:[%s0 + $0x198] sm:$0xff]
    %v83 = vld [vmem:[%s0 + $0x1a0] sm:$0xff]
    %v84 = vld [vmem:[%s0 + $0x1a8] sm:$0xff]
    %v85 = vld [vmem:[%s0 + $0x1b0] sm:$0xff]
    %v86 = vld [vmem:[%s0 + $0x1b8] sm:$0xff]
    %v87 = vld [vmem:[%s0 + $0x1c0] sm:$0xff]
    %v88 = vld [vmem:[%s0 + $0x1c8] sm:$0xff]
    %v89 = vld [vmem:[%s0 + $0x1d0] sm:$0xff]
    %v90 = vld [vmem:[%s0 + $0x1d8] sm:$0xff]
    %v91 = vld [vmem:[%s0 + $0x1e0] sm:$0xff]
    %v92 = vld [vmem:[%s0 + $0x1e8] sm:$0xff]
    %v93 = vld [vmem:[%s0 + $0x1f0] sm:$0xf]
    %v94 = vld [vmem:[%s2] sm:$0xff]
    %v95 = vld [vmem:[%s2 + $0x8] sm:$0xff]
    %v96 = vld [vmem:[%s2 + $0x10] sm:$0xff]
    %v97 = vld [vmem:[%s2 + $0x18] sm:$0xff]
    %99 = vset.pattern.permute.xlu0 0
    %100 = vperm.xlu0 %99, %v94
    %v101 = vpop.permute.xlu0 %100
    %104 = vset.pattern.permute.xlu0 0
    %105 = vperm.xlu0 %104, %v95
    %v106 = vpop.permute.xlu0 %105
    %109 = vset.pattern.permute.xlu0 0
    %110 = vperm.xlu0 %109, %v96
    %v111 = vpop.permute.xlu0 %110
    %114 = vset.pattern.permute.xlu0 0
    %115 = vperm.xlu0 %114, %v97
    %v116 = vpop.permute.xlu0 %115
    %vm118 = vcmask 130048
    %v120 = vsel %vm118, %v27, 0
    %v123 = vsel %vm118, %v28, 0
    %v126 = vsel %vm118, %v29, 0
    %v129 = vsel %vm118, %v30, 0
    %v132 = vsel %vm118, %v31, 0
    %v135 = vsel %vm118, %v32, 0
    %v138 = vsel %vm118, %v33, 0
    %v141 = vsel %vm118, %v34, 0
    %v144 = vsel %vm118, %v35, 0
    %v147 = vsel %vm118, %v36, 0
    %v150 = vsel %vm118, %v37, 0
    %v153 = vsel %vm118, %v38, 0
    %v156 = vsel %vm118, %v39, 0
    %v159 = vsel %vm118, %v40, 0
    %v162 = vsel %vm118, %v41, 0
    %v165 = vsel %vm118, %v42, 0
    %v168 = vsel %vm118, %v43, 0
    %v171 = vsel %vm118, %v44, 0
    %v174 = vsel %vm118, %v45, 0
    %v177 = vsel %vm118, %v46, 0
    %v180 = vsel %vm118, %v47, 0
    %v183 = vsel %vm118, %v48, 0
    %v186 = vsel %vm118, %v49, 0
    %v189 = vsel %vm118, %v50, 0
    %v192 = vsel %vm118, %v51, 0
    %v195 = vsel %vm118, %v52, 0
    %v198 = vsel %vm118, %v53, 0
    %v201 = vsel %vm118, %v54, 0
    %v204 = vsel %vm118, %v55, 0
    %v207 = vsel %vm118, %v56, 0
    %v210 = vsel %vm118, %v57, 0
    %v213 = vsel %vm118, %v58, 0
    %v216 = vsel %vm118, %v59, 0
    %v219 = vsel %vm118, %v60, 0
    %v222 = vsel %vm118, %v61, 0
    %v225 = vsel %vm118, %v62, 0
    %v228 = vsel %vm118, %v63, 0
    %v231 = vsel %vm118, %v64, 0
    %v234 = vsel %vm118, %v65, 0
    %v237 = vsel %vm118, %v66, 0
    %v240 = vsel %vm118, %v67, 0
    %v243 = vsel %vm118, %v68, 0
    %v246 = vsel %vm118, %v69, 0
    %v249 = vsel %vm118, %v70, 0
    %v252 = vsel %vm118, %v71, 0
    %v255 = vsel %vm118, %v72, 0
    %v258 = vsel %vm118, %v73, 0
    %v261 = vsel %vm118, %v74, 0
    %v264 = vsel %vm118, %v75, 0
    %v267 = vsel %vm118, %v76, 0
    %v270 = vsel %vm118, %v77, 0
    %v273 = vsel %vm118, %v78, 0
    %v276 = vsel %vm118, %v79, 0
    %v279 = vsel %vm118, %v80, 0
    %v282 = vsel %vm118, %v81, 0
    %v285 = vsel %vm118, %v82, 0
    %v288 = vsel %vm118, %v83, 0
    %v291 = vsel %vm118, %v84, 0
    %v294 = vsel %vm118, %v85, 0
    %v297 = vsel %vm118, %v86, 0
    %v300 = vsel %vm118, %v87, 0
    %v303 = vsel %vm118, %v88, 0
    %v306 = vsel %vm118, %v89, 0
    %v309 = vsel %vm118, %v90, 0
    %v312 = vsel %vm118, %v91, 0
    %v315 = vsel %vm118, %v92, 0
    %v318 = vsel %vm118, %v93, 0
    %320 = vmatprep.subr.mxu0 0.0
    %321 = vmatpush1.xpose.msra.mxu0 %v132
    %322 = vmatprep.subr.mxu0 0.0
    %323 = vmatpush1.xpose.msra.mxu0 %v135
    %324 = vmatprep.subr.mxu0 0.0
    %325 = vmatpush1.xpose.msra.mxu0 %v138
    %326 = vmatprep.subr.mxu0 0.0
    %327 = vmatpush1.xpose.msra.mxu0 %v141
    %328 = vmatprep.subr.mxu0 0.0
    %329 = vmatpush1.xpose.msra.mxu0 %v144
    %330 = vmatprep.subr.mxu0 0.0
    %331 = vmatpush1.xpose.msra.mxu0 %v147
    %332 = vmatprep.subr.mxu0 0.0
    %333 = vmatpush1.xpose.msra.mxu0 %v150
    %334 = vmatprep.subr.mxu0 0.0
    %335 = vmatpush1.xpose.msra.mxu0 %v153
    %336 = vmatprep.subr.mxu0 0.0
    %337 = vmatpush1.xpose.msra.mxu0 %v156
    %338 = vmatprep.subr.mxu0 0.0
    %339 = vmatpush1.xpose.msra.mxu0 %v159
    %340 = vmatprep.subr.mxu0 0.0
    %341 = vmatpush1.xpose.msra.mxu0 %v162
    %342 = vmatprep.subr.mxu0 0.0
    %343 = vmatpush1.xpose.msra.mxu0 %v165
    %344 = vmatprep.subr.mxu0 0.0
    %345 = vmatpush1.xpose.msra.mxu0 %v168
    %346 = vmatprep.subr.mxu0 0.0
    %347 = vmatpush1.xpose.msra.mxu0 %v171
    %348 = vmatprep.subr.mxu0 0.0
    %349 = vmatpush1.xpose.msra.mxu0 %v174
    %350 = vmatprep.subr.mxu0 0.0
    %351 = vmatpush1.xpose.msra.mxu0 %v177
    %352 = vmatprep.subr.mxu0 0.0
    %353 = vmatpush1.xpose.msra.mxu0 %v180
    %354 = vmatprep.subr.mxu0 0.0
    %355 = vmatpush1.xpose.msra.mxu0 %v183
    %356 = vmatprep.subr.mxu0 0.0
    %357 = vmatpush1.xpose.msra.mxu0 %v186
    %358 = vmatprep.subr.mxu0 0.0
    %359 = vmatpush1.xpose.msra.mxu0 %v189
    %360 = vmatprep.subr.mxu0 0.0
    %361 = vmatpush1.xpose.msra.mxu0 %v192
    %362 = vmatprep.subr.mxu0 0.0
    %363 = vmatpush1.xpose.msra.mxu0 %v195
    %364 = vmatprep.subr.mxu0 0.0
    %365 = vmatpush1.xpose.msra.mxu0 %v198
    %366 = vmatprep.subr.mxu0 0.0
    %367 = vmatpush1.xpose.msra.mxu0 %v201
    %368 = vmatprep.subr.mxu0 0.0
    %369 = vmatpush1.xpose.msra.mxu0 %v204
    %370 = vmatprep.subr.mxu0 0.0
    %371 = vmatpush1.xpose.msra.mxu0 %v207
    %372 = vmatprep.subr.mxu0 0.0
    %373 = vmatpush1.xpose.msra.mxu0 %v210
    %374 = vmatprep.subr.mxu0 0.0
    %375 = vmatpush1.xpose.msra.mxu0 %v213
    %376 = vmatprep.subr.mxu0 0.0
    %377 = vmatpush1.xpose.msra.mxu0 %v216
    %378 = vmatprep.subr.mxu0 0.0
    %379 = vmatpush1.xpose.msra.mxu0 %v219
    %380 = vmatprep.subr.mxu0 0.0
    %381 = vmatpush1.xpose.msra.mxu0 %v222
    %382 = vmatprep.subr.mxu0 0.0
    %383 = vmatpush1.xpose.msra.mxu0 %v225
    %384 = vmatprep.mubr.f32.mxu0 0.0
    %385 = vmatmul.mubr.f32.gmra.mrb[0].mxu0 %v120
    %v386 = vpop.f32.mrb[0].mxu0
    %v387 = vadd.f32 %v101, %v386
    %v388 = vpop.f32.mrb[0].mxu0
    %v389 = vadd.f32 %v101, %v388
    %390 = vmatprep.mubr.f32.mxu0 0.0
    %391 = vmatmul.mubr.f32.gmra.mrb[0].mxu0 %v123
    %v392 = vpop.f32.mrb[0].mxu0
    %v393 = vadd.f32 %v106, %v392
    %v394 = vpop.f32.mrb[0].mxu0
    %v395 = vadd.f32 %v106, %v394
    %396 = vmatprep.mubr.f32.mxu0 0.0
    %397 = vmatmul.mubr.f32.gmra.mrb[0].mxu0 %v126
    %v398 = vpop.f32.mrb[0].mxu0
    %v399 = vadd.f32 %v111, %v398
    %v400 = vpop.f32.mrb[0].mxu0
    %v401 = vadd.f32 %v111, %v400
    %402 = vmatprep.mubr.f32.mxu0 0.0
    %403 = vmatmul.mubr.f32.gmra.mrb[0].mxu0 %v129
    %v404 = vpop.f32.mrb[0].mxu0
    %v405 = vadd.f32 %v116, %v404
    %v406 = vpop.f32.mrb[0].mxu0
    %v407 = vadd.f32 %v116, %v406
    %408 = vdwg.mxu0
    %409 = vmatprep.subr.mxu0 0.0
    %410 = vmatpush1.xpose.msra.mxu0 %v228
    %411 = vmatprep.subr.mxu0 0.0
    %412 = vmatpush1.xpose.msra.mxu0 %v231
    %413 = vmatprep.subr.mxu0 0.0
    %414 = vmatpush1.xpose.msra.mxu0 %v234
    %415 = vmatprep.subr.mxu0 0.0
    %416 = vmatpush1.xpose.msra.mxu0 %v237
    %417 = vmatprep.subr.mxu0 0.0
    %418 = vmatpush1.xpose.msra.mxu0 %v240
    %419 = vmatprep.subr.mxu0 0.0
    %420 = vmatpush1.xpose.msra.mxu0 %v243
    %421 = vmatprep.subr.mxu0 0.0
    %422 = vmatpush1.xpose.msra.mxu0 %v246
    %423 = vmatprep.subr.mxu0 0.0
    %424 = vmatpush1.xpose.msra.mxu0 %v249
    %425 = vmatprep.subr.mxu0 0.0
    %426 = vmatpush1.xpose.msra.mxu0 %v252
    %427 = vmatprep.subr.mxu0 0.0
    %428 = vmatpush1.xpose.msra.mxu0 %v255
    %429 = vmatprep.subr.mxu0 0.0
    %430 = vmatpush1.xpose.msra.mxu0 %v258
    %431 = vmatprep.subr.mxu0 0.0
    %432 = vmatpush1.xpose.msra.mxu0 %v261
    %433 = vmatprep.subr.mxu0 0.0
    %434 = vmatpush1.xpose.msra.mxu0 %v264
    %435 = vmatprep.subr.mxu0 0.0
    %436 = vmatpush1.xpose.msra.mxu0 %v267
    %437 = vmatprep.subr.mxu0 0.0
    %438 = vmatpush1.xpose.msra.mxu0 %v270
    %439 = vmatprep.subr.mxu0 0.0
    %440 = vmatpush1.xpose.msra.mxu0 %v273
    %441 = vmatprep.subr.mxu0 0.0
    %442 = vmatpush1.xpose.msra.mxu0 %v276
    %443 = vmatprep.subr.mxu0 0.0
    %444 = vmatpush1.xpose.msra.mxu0 %v279
    %445 = vmatprep.subr.mxu0 0.0
    %446 = vmatpush1.xpose.msra.mxu0 %v282
    %447 = vmatprep.subr.mxu0 0.0
    %448 = vmatpush1.xpose.msra.mxu0 %v285
    %449 = vmatprep.subr.mxu0 0.0
    %450 = vmatpush1.xpose.msra.mxu0 %v288
    %451 = vmatprep.subr.mxu0 0.0
    %452 = vmatpush1.xpose.msra.mxu0 %v291
    %453 = vmatprep.subr.mxu0 0.0
    %454 = vmatpush1.xpose.msra.mxu0 %v294
    %455 = vmatprep.subr.mxu0 0.0
    %456 = vmatpush1.xpose.msra.mxu0 %v297
    %457 = vmatprep.subr.mxu0 0.0
    %458 = vmatpush1.xpose.msra.mxu0 %v300
    %459 = vmatprep.subr.mxu0 0.0
    %460 = vmatpush1.xpose.msra.mxu0 %v303
    %461 = vmatprep.subr.mxu0 0.0
    %462 = vmatpush1.xpose.msra.mxu0 %v306
    %463 = vmatprep.subr.mxu0 0.0
    %464 = vmatpush1.xpose.msra.mxu0 %v309
    %465 = vmatprep.subr.mxu0 0.0
    %466 = vmatpush1.xpose.msra.mxu0 %v312
    %467 = vmatprep.subr.mxu0 0.0
    %468 = vmatpush1.xpose.msra.mxu0 %v315
    %469 = vmatprep.subr.mxu0 0.0
    %470 = vmatpush1.xpose.msra.mxu0 %v318
    %471 = vmatprep.subr.mxu0 0.0
    %472 = vmatpush1.xpose.msra.mxu0 0.0
    %473 = vmatprep.mubr.f32.mxu0 0.0
    %474 = vmatmul.mubr.f32.gmra.mrb[0].mxu0 %v120
    %v475 = vpop.f32.mrb[0].mxu0
    %v476 = vadd.f32 %v101, %v475
    %v477 = vpop.f32.mrb[0].mxu0
    %v478 = vadd.f32 %v101, %v477
    %479 = vmatprep.mubr.f32.mxu0 0.0
    %480 = vmatmul.mubr.f32.gmra.mrb[0].mxu0 %v123
    %v481 = vpop.f32.mrb[0].mxu0
    %v482 = vadd.f32 %v106, %v481
    %v483 = vpop.f32.mrb[0].mxu0
    %v484 = vadd.f32 %v106, %v483
    %485 = vmatprep.mubr.f32.mxu0 0.0
    %486 = vmatmul.mubr.f32.gmra.mrb[0].mxu0 %v126
    %v487 = vpop.f32.mrb[0].mxu0
    %v488 = vadd.f32 %v111, %v487
    %v489 = vpop.f32.mrb[0].mxu0
    %v490 = vadd.f32 %v111, %v489
    %491 = vmatprep.mubr.f32.mxu0 0.0
    %492 = vmatmul.mubr.f32.gmra.mrb[0].mxu0 %v129
    %v493 = vpop.f32.mrb[0].mxu0
    %v494 = vadd.f32 %v116, %v493
    %v495 = vpop.f32.mrb[0].mxu0
    %v496 = vadd.f32 %v116, %v495
    %497 = vdwg.mxu0
    %v498 = vmax.f32 %v387, 0.0
    %v499 = vmax.f32 %v389, 0.0
    %v500 = vmax.f32 %v476, 0.0
    %v501 = vmax.f32 %v478, 0.0
    %v502 = vmax.f32 %v393, 0.0
    %v503 = vmax.f32 %v395, 0.0
    %v504 = vmax.f32 %v482, 0.0
    %v505 = vmax.f32 %v484, 0.0
    %v506 = vmax.f32 %v399, 0.0
    %v507 = vmax.f32 %v401, 0.0
    %v508 = vmax.f32 %v488, 0.0
    %v509 = vmax.f32 %v490, 0.0
    %v510 = vmax.f32 %v405, 0.0
    %v511 = vmax.f32 %v407, 0.0
    %v512 = vmax.f32 %v494, 0.0
    %v513 = vmax.f32 %v496, 0.0
    %v514 = vld [vmem:[%s3] sm:$0xff]
    %v515 = vld [vmem:[%s3 + $0x8] sm:$0xff]
    %v516 = vld [vmem:[%s3 + $0x10] sm:$0xff]
    %v517 = vld [vmem:[%s3 + $0x18] sm:$0xff]
    %v518 = vld [vmem:[%s4] sm:$0xff]
    %v519 = vld [vmem:[%s4 + $0x8] sm:$0xff]
    %v520 = vld [vmem:[%s4 + $0x10] sm:$0xff]
    %v521 = vld [vmem:[%s4 + $0x18] sm:$0xff]
    %523 = vset.pattern.permute.xlu0 0
    %524 = vperm.xlu0 %523, %v518
    %v525 = vpop.permute.xlu0 %524
    %528 = vset.pattern.permute.xlu0 0
    %529 = vperm.xlu0 %528, %v519
    %v530 = vpop.permute.xlu0 %529
    %533 = vset.pattern.permute.xlu0 0
    %534 = vperm.xlu0 %533, %v520
    %v535 = vpop.permute.xlu0 %534
    %538 = vset.pattern.permute.xlu0 0
    %539 = vperm.xlu0 %538, %v521
    %v540 = vpop.permute.xlu0 %539
    %vm542 = vcmask 261120
    %v544 = vsel %vm542, %v514, 0
    %v547 = vsel %vm542, %v515, 0
    %v550 = vsel %vm542, %v516, 0
    %v553 = vsel %vm542, %v517, 0
    %555 = vmatprep.subr.mxu0 %v499
    %556 = vmatpush1.msra.mxu0 %v498
    %557 = vmatprep.subr.mxu0 %v503
    %558 = vmatpush1.msra.mxu0 %v502
    %559 = vmatprep.subr.mxu0 %v507
    %560 = vmatpush1.msra.mxu0 %v506
    %561 = vmatprep.subr.mxu0 %v511
    %562 = vmatpush1.msra.mxu0 %v510
    %563 = vmatprep.subr.mxu0 0.0
    %564 = vmatpush1.msra.mxu0 0.0
    %565 = vmatprep.subr.mxu0 0.0
    %566 = vmatpush1.msra.mxu0 0.0
    %567 = vmatprep.subr.mxu0 0.0
    %568 = vmatpush1.msra.mxu0 0.0
    %569 = vmatprep.subr.mxu0 0.0
    %570 = vmatpush1.msra.mxu0 0.0
    %571 = vmatprep.subr.mxu0 0.0
    %572 = vmatpush1.msra.mxu0 0.0
    %573 = vmatprep.subr.mxu0 0.0
    %574 = vmatpush1.msra.mxu0 0.0
    %575 = vmatprep.subr.mxu0 0.0
    %576 = vmatpush1.msra.mxu0 0.0
    %577 = vmatprep.subr.mxu0 0.0
    %578 = vmatpush1.msra.mxu0 0.0
    %579 = vmatprep.subr.mxu0 0.0
    %580 = vmatpush1.msra.mxu0 0.0
    %581 = vmatprep.subr.mxu0 0.0
    %582 = vmatpush1.msra.mxu0 0.0
    %583 = vmatprep.subr.mxu0 0.0
    %584 = vmatpush1.msra.mxu0 0.0
    %585 = vmatprep.subr.mxu0 0.0
    %586 = vmatpush1.msra.mxu0 0.0
    %587 = vmatprep.subr.mxu0 0.0
    %588 = vmatpush1.msra.mxu0 0.0
    %589 = vmatprep.subr.mxu0 0.0
    %590 = vmatpush1.msra.mxu0 0.0
    %591 = vmatprep.subr.mxu0 0.0
    %592 = vmatpush1.msra.mxu0 0.0
    %593 = vmatprep.subr.mxu0 0.0
    %594 = vmatpush1.msra.mxu0 0.0
    %595 = vmatprep.subr.mxu0 0.0
    %596 = vmatpush1.msra.mxu0 0.0
    %597 = vmatprep.subr.mxu0 0.0
    %598 = vmatpush1.msra.mxu0 0.0
    %599 = vmatprep.subr.mxu0 0.0
    %600 = vmatpush1.msra.mxu0 0.0
    %601 = vmatprep.subr.mxu0 0.0
    %602 = vmatpush1.msra.mxu0 0.0
    %603 = vmatprep.subr.mxu0 0.0
    %604 = vmatpush1.msra.mxu0 0.0
    %605 = vmatprep.subr.mxu0 0.0
    %606 = vmatpush1.msra.mxu0 0.0
    %607 = vmatprep.subr.mxu0 0.0
    %608 = vmatpush1.msra.mxu0 0.0
    %609 = vmatprep.subr.mxu0 0.0
    %610 = vmatpush1.msra.mxu0 0.0
    %611 = vmatprep.subr.mxu0 0.0
    %612 = vmatpush1.msra.mxu0 0.0
    %613 = vmatprep.subr.mxu0 0.0
    %614 = vmatpush1.msra.mxu0 0.0
    %615 = vmatprep.subr.mxu0 0.0
    %616 = vmatpush1.msra.mxu0 0.0
    %617 = vmatprep.subr.mxu0 0.0
    %618 = vmatpush1.msra.mxu0 0.0
    %619 = vmatprep.mubr.f32.mxu0 0.0
    %620 = vmatmul.mubr.f32.gmra.mrb[0].mxu0 %v544
    %v621 = vpop.f32.mrb[0].mxu0
    %v622 = vadd.f32 %v525, %v621
    %v623 = vpop.f32.mrb[0].mxu0
    %v624 = vadd.f32 %v525, %v623
    %625 = vmatprep.mubr.f32.mxu0 0.0
    %626 = vmatmul.mubr.f32.gmra.mrb[0].mxu0 %v547
    %v627 = vpop.f32.mrb[0].mxu0
    %v628 = vadd.f32 %v530, %v627
    %v629 = vpop.f32.mrb[0].mxu0
    %v630 = vadd.f32 %v530, %v629
    %631 = vmatprep.mubr.f32.mxu0 0.0
    %632 = vmatmul.mubr.f32.gmra.mrb[0].mxu0 %v550
    %v633 = vpop.f32.mrb[0].mxu0
    %v634 = vadd.f32 %v535, %v633
    %v635 = vpop.f32.mrb[0].mxu0
    %v636 = vadd.f32 %v535, %v635
    %637 = vmatprep.mubr.f32.mxu0 0.0
    %638 = vmatmul.mubr.f32.gmra.mrb[0].mxu0 %v553
    %v639 = vpop.f32.mrb[0].mxu0
    %v640 = vadd.f32 %v540, %v639
    %v641 = vpop.f32.mrb[0].mxu0
    %v642 = vadd.f32 %v540, %v641
    %643 = vdwg.mxu0
    %644 = vmatprep.subr.mxu0 %v501
    %645 = vmatpush1.msra.mxu0 %v500
    %646 = vmatprep.subr.mxu0 %v505
    %647 = vmatpush1.msra.mxu0 %v504
    %648 = vmatprep.subr.mxu0 %v509
    %649 = vmatpush1.msra.mxu0 %v508
    %650 = vmatprep.subr.mxu0 %v513
    %651 = vmatpush1.msra.mxu0 %v512
    %652 = vmatprep.subr.mxu0 0.0
    %653 = vmatpush1.msra.mxu0 0.0
    %654 = vmatprep.subr.mxu0 0.0
    %655 = vmatpush1.msra.mxu0 0.0
    %656 = vmatprep.subr.mxu0 0.0
    %657 = vmatpush1.msra.mxu0 0.0
    %658 = vmatprep.subr.mxu0 0.0
    %659 = vmatpush1.msra.mxu0 0.0
    %660 = vmatprep.subr.mxu0 0.0
    %661 = vmatpush1.msra.mxu0 0.0
    %662 = vmatprep.subr.mxu0 0.0
    %663 = vmatpush1.msra.mxu0 0.0
    %664 = vmatprep.subr.mxu0 0.0
    %665 = vmatpush1.msra.mxu0 0.0
    %666 = vmatprep.subr.mxu0 0.0
    %667 = vmatpush1.msra.mxu0 0.0
    %668 = vmatprep.subr.mxu0 0.0
    %669 = vmatpush1.msra.mxu0 0.0
    %670 = vmatprep.subr.mxu0 0.0
    %671 = vmatpush1.msra.mxu0 0.0
    %672 = vmatprep.subr.mxu0 0.0
    %673 = vmatpush1.msra.mxu0 0.0
    %674 = vmatprep.subr.mxu0 0.0
    %675 = vmatpush1.msra.mxu0 0.0
    %676 = vmatprep.subr.mxu0 0.0
    %677 = vmatpush1.msra.mxu0 0.0
    %678 = vmatprep.subr.mxu0 0.0
    %679 = vmatpush1.msra.mxu0 0.0
    %680 = vmatprep.subr.mxu0 0.0
    %681 = vmatpush1.msra.mxu0 0.0
    %682 = vmatprep.subr.mxu0 0.0
    %683 = vmatpush1.msra.mxu0 0.0
    %684 = vmatprep.subr.mxu0 0.0
    %685 = vmatpush1.msra.mxu0 0.0
    %686 = vmatprep.subr.mxu0 0.0
    %687 = vmatpush1.msra.mxu0 0.0
    %688 = vmatprep.subr.mxu0 0.0
    %689 = vmatpush1.msra.mxu0 0.0
    %690 = vmatprep.subr.mxu0 0.0
    %691 = vmatpush1.msra.mxu0 0.0
    %692 = vmatprep.subr.mxu0 0.0
    %693 = vmatpush1.msra.mxu0 0.0
    %694 = vmatprep.subr.mxu0 0.0
    %695 = vmatpush1.msra.mxu0 0.0
    %696 = vmatprep.subr.mxu0 0.0
    %697 = vmatpush1.msra.mxu0 0.0
    %698 = vmatprep.subr.mxu0 0.0
    %699 = vmatpush1.msra.mxu0 0.0
    %700 = vmatprep.subr.mxu0 0.0
    %701 = vmatpush1.msra.mxu0 0.0
    %702 = vmatprep.subr.mxu0 0.0
    %703 = vmatpush1.msra.mxu0 0.0
    %704 = vmatprep.subr.mxu0 0.0
    %705 = vmatpush1.msra.mxu0 0.0
    %706 = vmatprep.subr.mxu0 0.0
    %707 = vmatpush1.msra.mxu0 0.0
    %708 = vmatprep.mubr.f32.mxu0 0.0
    %709 = vmatmul.mubr.f32.gmra.mrb[0].mxu0 %v544
    %v710 = vpop.f32.mrb[0].mxu0
    %v711 = vadd.f32 %v525, %v710
    %v712 = vpop.f32.mrb[0].mxu0
    %v713 = vadd.f32 %v525, %v712
    %714 = vmatprep.mubr.f32.mxu0 0.0
    %715 = vmatmul.mubr.f32.gmra.mrb[0].mxu0 %v547
    %v716 = vpop.f32.mrb[0].mxu0
    %v717 = vadd.f32 %v530, %v716
    %v718 = vpop.f32.mrb[0].mxu0
    %v719 = vadd.f32 %v530, %v718
    %720 = vmatprep.mubr.f32.mxu0 0.0
    %721 = vmatmul.mubr.f32.gmra.mrb[0].mxu0 %v550
    %v722 = vpop.f32.mrb[0].mxu0
    %v723 = vadd.f32 %v535, %v722
    %v724 = vpop.f32.mrb[0].mxu0
    %v725 = vadd.f32 %v535, %v724
    %726 = vmatprep.mubr.f32.mxu0 0.0
    %727 = vmatmul.mubr.f32.gmra.mrb[0].mxu0 %v553
    %v728 = vpop.f32.mrb[0].mxu0
    %v729 = vadd.f32 %v540, %v728
    %v730 = vpop.f32.mrb[0].mxu0
    %v731 = vadd.f32 %v540, %v730
    %732 = vdwg.mxu0
    %v733 = vmax.f32 %v622, 0.0
    %v734 = vmax.f32 %v624, 0.0
    %v735 = vmax.f32 %v711, 0.0
    %v736 = vmax.f32 %v713, 0.0
    %v737 = vmax.f32 %v628, 0.0
    %v738 = vmax.f32 %v630, 0.0
    %v739 = vmax.f32 %v717, 0.0
    %v740 = vmax.f32 %v719, 0.0
    %v741 = vmax.f32 %v634, 0.0
    %v742 = vmax.f32 %v636, 0.0
    %v743 = vmax.f32 %v723, 0.0
    %v744 = vmax.f32 %v725, 0.0
    %v745 = vmax.f32 %v640, 0.0
    %v746 = vmax.f32 %v642, 0.0
    %v747 = vmax.f32 %v729, 0.0
    %v748 = vmax.f32 %v731, 0.0
    %v749 = vld [vmem:[%s5] sm:$0xff]
    %v750 = vld [vmem:[%s6] sm:$0xff]
    %752 = vset.pattern.permute.xlu0 0
    %753 = vperm.xlu0 %752, %v750
    %v754 = vpop.permute.xlu0 %753
    %v757 = vsel %vm542, %v749, 0
    %759 = vmatprep.subr.mxu0 %v734
    %760 = vmatpush1.msra.mxu0 %v733
    %761 = vmatprep.subr.mxu0 %v738
    %762 = vmatpush1.msra.mxu0 %v737
    %763 = vmatprep.subr.mxu0 %v742
    %764 = vmatpush1.msra.mxu0 %v741
    %765 = vmatprep.subr.mxu0 %v746
    %766 = vmatpush1.msra.mxu0 %v745
    %767 = vmatprep.subr.mxu0 0.0
    %768 = vmatpush1.msra.mxu0 0.0
    %769 = vmatprep.subr.mxu0 0.0
    %770 = vmatpush1.msra.mxu0 0.0
    %771 = vmatprep.subr.mxu0 0.0
    %772 = vmatpush1.msra.mxu0 0.0
    %773 = vmatprep.subr.mxu0 0.0
    %774 = vmatpush1.msra.mxu0 0.0
    %775 = vmatprep.subr.mxu0 0.0
    %776 = vmatpush1.msra.mxu0 0.0
    %777 = vmatprep.subr.mxu0 0.0
    %778 = vmatpush1.msra.mxu0 0.0
    %779 = vmatprep.subr.mxu0 0.0
    %780 = vmatpush1.msra.mxu0 0.0
    %781 = vmatprep.subr.mxu0 0.0
    %782 = vmatpush1.msra.mxu0 0.0
    %783 = vmatprep.subr.mxu0 0.0
    %784 = vmatpush1.msra.mxu0 0.0
    %785 = vmatprep.subr.mxu0 0.0
    %786 = vmatpush1.msra.mxu0 0.0
    %787 = vmatprep.subr.mxu0 0.0
    %788 = vmatpush1.msra.mxu0 0.0
    %789 = vmatprep.subr.mxu0 0.0
    %790 = vmatpush1.msra.mxu0 0.0
    %791 = vmatprep.subr.mxu0 0.0
    %792 = vmatpush1.msra.mxu0 0.0
    %793 = vmatprep.subr.mxu0 0.0
    %794 = vmatpush1.msra.mxu0 0.0
    %795 = vmatprep.subr.mxu0 0.0
    %796 = vmatpush1.msra.mxu0 0.0
    %797 = vmatprep.subr.mxu0 0.0
    %798 = vmatpush1.msra.mxu0 0.0
    %799 = vmatprep.subr.mxu0 0.0
    %800 = vmatpush1.msra.mxu0 0.0
    %801 = vmatprep.subr.mxu0 0.0
    %802 = vmatpush1.msra.mxu0 0.0
    %803 = vmatprep.subr.mxu0 0.0
    %804 = vmatpush1.msra.mxu0 0.0
    %805 = vmatprep.subr.mxu0 0.0
    %806 = vmatpush1.msra.mxu0 0.0
    %807 = vmatprep.subr.mxu0 0.0
    %808 = vmatpush1.msra.mxu0 0.0
    %809 = vmatprep.subr.mxu0 0.0
    %810 = vmatpush1.msra.mxu0 0.0
    %811 = vmatprep.subr.mxu0 0.0
    %812 = vmatpush1.msra.mxu0 0.0
    %813 = vmatprep.subr.mxu0 0.0
    %814 = vmatpush1.msra.mxu0 0.0
    %815 = vmatprep.subr.mxu0 0.0
    %816 = vmatpush1.msra.mxu0 0.0
    %817 = vmatprep.subr.mxu0 0.0
    %818 = vmatpush1.msra.mxu0 0.0
    %819 = vmatprep.subr.mxu0 0.0
    %820 = vmatpush1.msra.mxu0 0.0
    %821 = vmatprep.subr.mxu0 0.0
    %822 = vmatpush1.msra.mxu0 0.0
    %823 = vmatprep.mubr.f32.mxu0 0.0
    %824 = vmatmul.mubr.f32.gmra.mrb[0].mxu0 %v757
    %v825 = vpop.f32.mrb[0].mxu0
    %v826 = vadd.f32 %v754, %v825
    %v827 = vpop.f32.mrb[0].mxu0
    %v828 = vadd.f32 %v754, %v827
    %829 = vdwg.mxu0
    %830 = vmatprep.subr.mxu0 %v736
    %831 = vmatpush1.msra.mxu0 %v735
    %832 = vmatprep.subr.mxu0 %v740
    %833 = vmatpush1.msra.mxu0 %v739
    %834 = vmatprep.subr.mxu0 %v744
    %835 = vmatpush1.msra.mxu0 %v743
    %836 = vmatprep.subr.mxu0 %v748
    %837 = vmatpush1.msra.mxu0 %v747
    %838 = vmatprep.subr.mxu0 0.0
    %839 = vmatpush1.msra.mxu0 0.0
    %840 = vmatprep.subr.mxu0 0.0
    %841 = vmatpush1.msra.mxu0 0.0
    %842 = vmatprep.subr.mxu0 0.0
    %843 = vmatpush1.msra.mxu0 0.0
    %844 = vmatprep.subr.mxu0 0.0
    %845 = vmatpush1.msra.mxu0 0.0
    %846 = vmatprep.subr.mxu0 0.0
    %847 = vmatpush1.msra.mxu0 0.0
    %848 = vmatprep.subr.mxu0 0.0
    %849 = vmatpush1.msra.mxu0 0.0
    %850 = vmatprep.subr.mxu0 0.0
    %851 = vmatpush1.msra.mxu0 0.0
    %852 = vmatprep.subr.mxu0 0.0
    %853 = vmatpush1.msra.mxu0 0.0
    %854 = vmatprep.subr.mxu0 0.0
    %855 = vmatpush1.msra.mxu0 0.0
    %856 = vmatprep.subr.mxu0 0.0
    %857 = vmatpush1.msra.mxu0 0.0
    %858 = vmatprep.subr.mxu0 0.0
    %859 = vmatpush1.msra.mxu0 0.0
    %860 = vmatprep.subr.mxu0 0.0
    %861 = vmatpush1.msra.mxu0 0.0
    %862 = vmatprep.subr.mxu0 0.0
    %863 = vmatpush1.msra.mxu0 0.0
    %864 = vmatprep.subr.mxu0 0.0
    %865 = vmatpush1.msra.mxu0 0.0
    %866 = vmatprep.subr.mxu0 0.0
    %867 = vmatpush1.msra.mxu0 0.0
    %868 = vmatprep.subr.mxu0 0.0
    %869 = vmatpush1.msra.mxu0 0.0
    %870 = vmatprep.subr.mxu0 0.0
    %871 = vmatpush1.msra.mxu0 0.0
    %872 = vmatprep.subr.mxu0 0.0
    %873 = vmatpush1.msra.mxu0 0.0
    %874 = vmatprep.subr.mxu0 0.0
    %875 = vmatpush1.msra.mxu0 0.0
    %876 = vmatprep.subr.mxu0 0.0
    %877 = vmatpush1.msra.mxu0 0.0
    %878 = vmatprep.subr.mxu0 0.0
    %879 = vmatpush1.msra.mxu0 0.0
    %880 = vmatprep.subr.mxu0 0.0
    %881 = vmatpush1.msra.mxu0 0.0
    %882 = vmatprep.subr.mxu0 0.0
    %883 = vmatpush1.msra.mxu0 0.0
    %884 = vmatprep.subr.mxu0 0.0
    %885 = vmatpush1.msra.mxu0 0.0
    %886 = vmatprep.subr.mxu0 0.0
    %887 = vmatpush1.msra.mxu0 0.0
    %888 = vmatprep.subr.mxu0 0.0
    %889 = vmatpush1.msra.mxu0 0.0
    %890 = vmatprep.subr.mxu0 0.0
    %891 = vmatpush1.msra.mxu0 0.0
    %892 = vmatprep.subr.mxu0 0.0
    %893 = vmatpush1.msra.mxu0 0.0
    %894 = vmatprep.mubr.f32.mxu0 0.0
    %895 = vmatmul.mubr.f32.gmra.mrb[0].mxu0 %v757
    %v896 = vpop.f32.mrb[0].mxu0
    %v897 = vadd.f32 %v754, %v896
    %v898 = vpop.f32.mrb[0].mxu0
    %v899 = vadd.f32 %v754, %v898
    %900 = vdwg.mxu0
    %901 = vst [vmem:[#allocation2] sm:$0xff] %v826
    %902 = vst [vmem:[#allocation2 + $0x8] sm:$0xff] %v828
    %903 = vst [vmem:[#allocation2 + $0x10] sm:$0xff] %v897
    %vm904 = vcmask 949248
    %905 = vst.msk [vmem:[#allocation2 + $0x18] sm:$0xff] %vm904, %v899
    // Predicated region
    $region30: #{tpu_custom_call.1} parent=1 // pred_check
      _
    $region31: #{tpu_custom_call.1} parent=1 // pred_check_branch
      %907 = sbr.rel (0) target = $region33
    $region32: #{tpu_custom_call.1} parent=1 // pred_region
      %s909 = ssub.s32 512, 512
      %910 = vsyncadd [#allocation3], %s909
      %s912 = sshll.u32 [#allocation2], 4
      %s913 = int_to_ptr.vmem [resolvable:$true] %s912
      %915 = dma.vmem_to_hbm [thread:$0]  %s913, 512, %s7, [#allocation3]
    $region33: #{tpu_custom_call.1} parent=1 // pred_fallthru
      _
    // Predicated region
    $region34: #{tpu_custom_call.1} parent=1 // pred_check
      _
    $region35: #{tpu_custom_call.1} parent=1 // pred_check_branch
      %917 = sbr.rel (0) target = $region37
    $region36: #{tpu_custom_call.1} parent=1 // pred_region
      %918 = dma.done [#allocation3], 512
    $region37: #{tpu_custom_call.1} parent=1 // pred_fallthru
      _
    %919 = vsyncpa [#allocation3], 1

</llo_original>
